<compile_context>
chip_gen: v5e
topology: v5e:2x2
jax: 0.10.0
libtpu: 0.0.40
codegen_flags: <defaults>
</compile_context>

<pallas_src>
import jax
import jax.numpy as jnp
from jax import lax
from jax.experimental import pallas as pl
from jax.experimental.pallas import tpu as pltpu


def _round_up(x: int, m: int) -> int:
    return ((x + m - 1) // m) * m


def _cdiv(a: int, b: int) -> int:
    return -(-a // b)


def _accumulate_tile(x_ref, t_ref, c, nchunk, tile_start, hw, masked, unroll):
    """Softmax + per-class partial sums over one (C, tile_p) window, 128 lanes at a time."""

    def chunk_body(k, carry):
        t_acc, i_acc, p_acc = carry
        lo = pl.multiple_of(k * 128, 128)
        xk = x_ref[0, :, pl.ds(lo, 128)].astype(jnp.float32)   # (C, 128) logits
        tk = t_ref[0, :, pl.ds(lo, 128)].astype(jnp.float32)   # (C, 128) target
        if masked:
            # Boundary tile: out-of-range columns may contain garbage (no host
            # padding), so mask x, t and (below) p before they touch any sum.
            col = tile_start + lo + lax.broadcasted_iota(jnp.int32, (c, 128), 1)
            valid = col < hw
            xk = jnp.where(valid, xk, 0.0)
            tk = jnp.where(valid, tk, 0.0)
        # Per-pixel softmax over the class (sublane) axis.
        m = jnp.max(xk, axis=0, keepdims=True)
        e = jnp.exp(xk - m)
        inv = pl.reciprocal(jnp.sum(e, axis=0, keepdims=True), approx=False)
        p = e * inv
        if masked:
            p = jnp.where(valid, p, 0.0)
        return (t_acc + tk, i_acc + p * tk, p_acc + p)

    zero = jnp.zeros((c, 128), jnp.float32)
    return lax.fori_loop(0, nchunk, chunk_body, (zero, zero, zero), unroll=unroll)


def _gdl_kernel_factory(c, tile_p, hw, tiles_per_split, ragged, unroll):
    nchunk = tile_p // 128

    def kernel(x_ref, t_ref, tsum_ref, inter_ref, psum_ref):
        s = pl.program_id(0)   # pixel-range split (parallel across TensorCores)
        b = pl.program_id(1)   # batch index
        j = pl.program_id(2)   # pixel-tile index within this split

        # Zero this split's resident output accumulators at the start of its
        # (batch, tile) sweep.
        @pl.when((b == 0) & (j == 0))
        def _():
            z = jnp.zeros(tsum_ref.shape, jnp.float32)
            tsum_ref[...] = z
            inter_ref[...] = z
            psum_ref[...] = z

        tile_start = (s * tiles_per_split + j) * tile_p

        def run(masked):
            t_acc, i_acc, p_acc = _accumulate_tile(
                x_ref, t_ref, c, nchunk, tile_start, hw, masked, unroll)
            tsum_ref[0] += t_acc
            inter_ref[0] += i_acc
            psum_ref[0] += p_acc

        if ragged:
            is_full = tile_start + tile_p <= hw

            @pl.when(is_full)
            def _():
                run(False)

            @pl.when(jnp.logical_not(is_full))
            def _():
                run(True)
        else:
            run(False)

    return kernel


def generalized_dice_loss(output, target, smooth: float = 1e-05, *,
                          tile_p_max: int = 32768, num_splits: int = 2):
    """output: (N, C, *spatial) logits; target: (N, C, *spatial), any dtype."""
    n, c = int(output.shape[0]), int(output.shape[1])
    hw = 1
    for d in output.shape[2:]:
        hw *= int(d)

    # Free, contiguous reshape (no transpose, no pad): (N, C, H*W).
    x = output.reshape(n, c, hw)
    t = target.reshape(n, c, hw)          # keep native (possibly narrow) dtype

    # Tile size: multiple of 128 lanes, as large as possible.  Budget the
    # double-buffered input windows at ~12 MiB so the per-core working set
    # (chunk-wise body => tiny intermediates) stays comfortably inside the
    # 32 MiB limit we request below on every generation (v7x included).
    bytes_per_col = c * (jnp.dtype(x.dtype).itemsize + jnp.dtype(t.dtype).itemsize)
    cap_by_vmem = max(128, (((12 << 20) // (2 * bytes_per_col)) // 128) * 128)
    tile_p = max(128, (min(int(tile_p_max), _round_up(hw, 128), cap_by_vmem) // 128) * 128)

    num_tiles = _cdiv(hw, tile_p)
    ns = max(1, min(int(num_splits), num_tiles))      # pixel-range splits (v7x: 2 TCs)
    tiles_per_split = _cdiv(num_tiles, ns)
    ragged = (ns * tiles_per_split * tile_p) != hw    # any partial / virtual tile?
    unroll = max(1, min(8, tile_p // 128))

    grid = (ns, n, tiles_per_split)

    def in_map(s, b, j):
        # Clamp virtual (fully out-of-range) tiles onto the last real block;
        # the in-kernel mask zeroes their contribution.
        return (b, 0, jnp.minimum(s * tiles_per_split + j, num_tiles - 1))

    kernel = _gdl_kernel_factory(c, tile_p, hw, tiles_per_split, ragged, unroll)

    part_shape = jax.ShapeDtypeStruct((ns, c, 128), jnp.float32)
    part_spec = pl.BlockSpec((1, c, 128), lambda s, b, j: (s, 0, 0))

    tsum_p, inter_p, psum_p = pl.pallas_call(
        kernel,
        out_shape=(part_shape, part_shape, part_shape),
        grid_spec=pltpu.PrefetchScalarGridSpec(
            num_scalar_prefetch=0,
            grid=grid,
            in_specs=[
                pl.BlockSpec((1, c, tile_p), in_map),
                pl.BlockSpec((1, c, tile_p), in_map),
            ],
            out_specs=[part_spec, part_spec, part_spec],
        ),
        compiler_params=pltpu.CompilerParams(
            dimension_semantics=("parallel", "arbitrary", "arbitrary"),
            vmem_limit_bytes=32 << 20,
        ),
    )(x, t)

    # Tiny epilogue in plain JAX: combine per-split lane-dense partials and
    # form the scalar loss (matches the PyTorch forward exactly).
    ts = jnp.sum(tsum_p, axis=(0, 2))        # (C,) per-class target sum
    inter = jnp.sum(inter_p, axis=(0, 2))    # (C,) per-class intersect
    ps = jnp.sum(psum_p, axis=(0, 2))        # (C,) per-class softmax-prob sum
    w = 1.0 / jnp.maximum(ts * ts, smooth)
    intersect = jnp.sum(inter * w)
    denominator = jnp.sum((ps + ts) * w)
    return 1.0 - 2.0 * intersect / jnp.maximum(denominator, smooth)


def _reference_gdl(output, target, smooth=1e-05):
    c = output.shape[1]
    x = jax.nn.softmax(output.astype(jnp.float32), axis=1)
    x = jnp.moveaxis(x, 1, 0).reshape(c, -1)
    t = jnp.moveaxis(target, 1, 0).reshape(c, -1).astype(jnp.float32)
    ts = t.sum(-1)
    w = 1.0 / jnp.maximum(ts * ts, smooth)
    intersect = ((x * t).sum(-1) * w).sum()
    denom = ((x + t).sum(-1) * w).sum()
    return 1.0 - 2.0 * intersect / jnp.maximum(denom, smooth)


if __name__ == "__main__":
    key = jax.random.PRNGKey(0)
    k1, k2, k3, k4 = jax.random.split(key, 4)

    # Case 1: the module's nominal small shape (N=2, C=4, 16x16), aligned HW.
    N, C, H, W = 2, 4, 16, 16
    logits = jax.random.normal(k1, (N, C, H, W), dtype=jnp.float32)
    labels = jax.random.randint(k2, (N, H, W), 0, C)
    target = jax.nn.one_hot(labels, C, axis=1).astype(jnp.bfloat16)  # (N, C, H, W)
    loss = jax.block_until_ready(generalized_dice_loss(logits, target))
    ref = _reference_gdl(logits, target)
    assert jnp.allclose(loss, ref, atol=1e-5, rtol=1e-5), (loss, ref)

    # Case 2: ragged spatial extent, forced multi-tile + 2-way split + masked
    # boundary tile + clamped virtual tile (exercises every kernel path).
    N2, C2, H2, W2 = 2, 4, 17, 19
    logits2 = jax.random.normal(k3, (N2, C2, H2, W2), dtype=jnp.float32)
    labels2 = jax.random.randint(k4, (N2, H2, W2), 0, C2)
    target2 = jax.nn.one_hot(labels2, C2, axis=1).astype(jnp.float32)
    loss2 = jax.block_until_ready(
        generalized_dice_loss(logits2, target2, tile_p_max=128, num_splits=2))
    ref2 = _reference_gdl(logits2, target2)
    assert jnp.allclose(loss2, ref2, atol=1e-5, rtol=1e-5), (loss2, ref2)

    print("KERNEL_OK")
</pallas_src>

<mosaic_0001>
module attributes {stable_mosaic.version = 11 : i64} {
  func.func @kernel(%arg0: i32, %arg1: i32, %arg2: i32, %arg3: memref<1x4x256xf32, #tpu.memory_space<vmem>>, %arg4: memref<1x4x256xbf16, #tpu.memory_space<vmem>>, %arg5: memref<1x4x128xf32, #tpu.memory_space<vmem>>, %arg6: memref<1x4x128xf32, #tpu.memory_space<vmem>>, %arg7: memref<1x4x128xf32, #tpu.memory_space<vmem>>) attributes {dimension_semantics = [#tpu.dimension_semantics<parallel>, #tpu.dimension_semantics<arbitrary>, #tpu.dimension_semantics<arbitrary>], iteration_bounds = array<i64: 1, 2, 1>, scalar_prefetch = 0 : i64, scratch_operands = 0 : i64, tpu.core_type = #tpu.core_type<tc>, window_params = [{transform_indices = @transform_0, window_bounds = array<i64: 1, 4, 256>}, {transform_indices = @transform_1, window_bounds = array<i64: 1, 4, 256>}, {transform_indices = @transform_2, window_bounds = array<i64: 1, 4, 128>}, {transform_indices = @transform_3, window_bounds = array<i64: 1, 4, 128>}, {transform_indices = @transform_4, window_bounds = array<i64: 1, 4, 128>}]} {
    %c0_i32 = arith.constant 0 : i32
    %0 = arith.cmpi eq, %arg1, %c0_i32 : i32
    %c0_i32_0 = arith.constant 0 : i32
    %1 = arith.cmpi eq, %arg2, %c0_i32_0 : i32
    %2 = arith.andi %0, %1 : i1
    %3 = arith.extui %2 : i1 to i32
    %c0_i32_1 = arith.constant 0 : i32
    %4 = arith.cmpi ne, %3, %c0_i32_1 : i32
    scf.if %4 {
      %cst_33 = arith.constant 0.000000e+00 : f32
      %70 = vector.broadcast %cst_33 : f32 to vector<1x4x128xf32>
      %c0_34 = arith.constant 0 : index
      %c0_35 = arith.constant 0 : index
      %c0_36 = arith.constant 0 : index
      %71 = vector.load %arg5[%c0_34, %c0_35, %c0_36] : memref<1x4x128xf32, #tpu.memory_space<vmem>>, vector<1x4x128xf32>
      tpu.vector_store %arg5[%c0_34, %c0_35, %c0_36], %70 {strides = array<i32>} : memref<1x4x128xf32, #tpu.memory_space<vmem>>, vector<1x4x128xf32>,
      %c0_37 = arith.constant 0 : index
      %c0_38 = arith.constant 0 : index
      %c0_39 = arith.constant 0 : index
      %72 = vector.load %arg6[%c0_37, %c0_38, %c0_39] : memref<1x4x128xf32, #tpu.memory_space<vmem>>, vector<1x4x128xf32>
      tpu.vector_store %arg6[%c0_37, %c0_38, %c0_39], %70 {strides = array<i32>} : memref<1x4x128xf32, #tpu.memory_space<vmem>>, vector<1x4x128xf32>,
      %c0_40 = arith.constant 0 : index
      %c0_41 = arith.constant 0 : index
      %c0_42 = arith.constant 0 : index
      %73 = vector.load %arg7[%c0_40, %c0_41, %c0_42] : memref<1x4x128xf32, #tpu.memory_space<vmem>>, vector<1x4x128xf32>
      tpu.vector_store %arg7[%c0_40, %c0_41, %c0_42], %70 {strides = array<i32>} : memref<1x4x128xf32, #tpu.memory_space<vmem>>, vector<1x4x128xf32>,
    } else {
    }
    %cst = arith.constant 0.000000e+00 : f32
    %5 = vector.broadcast %cst : f32 to vector<4x128xf32>
    %c0_i32_2 = arith.constant 0 : i32
    %c128_i32 = arith.constant 128 : i32
    %6 = arith.muli %c0_i32_2, %c128_i32 : i32
    %7 = tpu.assume_multiple %6, 128 : i32
    %c0 = arith.constant 0 : index
    %c0_3 = arith.constant 0 : index
    %8 = arith.index_cast %7 : i32 to index
    %9 = vector.load %arg3[%c0, %c0_3, %8] : memref<1x4x256xf32, #tpu.memory_space<vmem>>, vector<1x4x128xf32>
    %10 = vector.shape_cast %9 : vector<1x4x128xf32> to vector<4x128xf32>
    %c0_4 = arith.constant 0 : index
    %c0_5 = arith.constant 0 : index
    %11 = arith.index_cast %7 : i32 to index
    %12 = vector.load %arg4[%c0_4, %c0_5, %11] : memref<1x4x256xbf16, #tpu.memory_space<vmem>>, vector<1x4x128xbf16>
    %13 = vector.shape_cast %12 : vector<1x4x128xbf16> to vector<4x128xbf16>
    %14 = arith.extf %13 : vector<4x128xbf16> to vector<4x128xf32>
    %cst_6 = arith.constant dense<0xFF800000> : vector<128xf32>
    %15 = vector.multi_reduction <maximumf>, %10, %cst_6 [0] : vector<4x128xf32> to vector<128xf32>
    %16 = vector.shape_cast %15 : vector<128xf32> to vector<1x128xf32>
    %17 = vector.broadcast %16 : vector<1x128xf32> to vector<4x128xf32>
    %18 = arith.subf %10, %17 : vector<4x128xf32>
    %19 = math.exp %18 : vector<4x128xf32>
    %cst_7 = arith.constant dense<0.000000e+00> : vector<128xf32>
    %20 = vector.multi_reduction <add>, %19, %cst_7 [0] : vector<4x128xf32> to vector<128xf32>
    %21 = vector.shape_cast %20 : vector<128xf32> to vector<1x128xf32>
    %22 = tpu.reciprocal %21 : vector<1x128xf32> -> vector<1x128xf32>
    %23 = vector.broadcast %22 : vector<1x128xf32> to vector<4x128xf32>
    %24 = arith.mulf %19, %23 : vector<4x128xf32>
    %25 = arith.addf %5, %14 : vector<4x128xf32>
    %26 = arith.mulf %24, %14 : vector<4x128xf32>
    %27 = arith.addf %5, %26 : vector<4x128xf32>
    %28 = arith.addf %5, %24 : vector<4x128xf32>
    %c1_i32 = arith.constant 1 : i32
    %c128_i32_8 = arith.constant 128 : i32
    %29 = arith.muli %c1_i32, %c128_i32_8 : i32
    %30 = tpu.assume_multiple %29, 128 : i32
    %c0_9 = arith.constant 0 : index
    %c0_10 = arith.constant 0 : index
    %31 = arith.index_cast %30 : i32 to index
    %32 = vector.load %arg3[%c0_9, %c0_10, %31] : memref<1x4x256xf32, #tpu.memory_space<vmem>>, vector<1x4x128xf32>
    %33 = vector.shape_cast %32 : vector<1x4x128xf32> to vector<4x128xf32>
    %c0_11 = arith.constant 0 : index
    %c0_12 = arith.constant 0 : index
    %34 = arith.index_cast %30 : i32 to index
    %35 = vector.load %arg4[%c0_11, %c0_12, %34] : memref<1x4x256xbf16, #tpu.memory_space<vmem>>, vector<1x4x128xbf16>
    %36 = vector.shape_cast %35 : vector<1x4x128xbf16> to vector<4x128xbf16>
    %37 = arith.extf %36 : vector<4x128xbf16> to vector<4x128xf32>
    %cst_13 = arith.constant dense<0xFF800000> : vector<128xf32>
    %38 = vector.multi_reduction <maximumf>, %33, %cst_13 [0] : vector<4x128xf32> to vector<128xf32>
    %39 = vector.shape_cast %38 : vector<128xf32> to vector<1x128xf32>
    %40 = vector.broadcast %39 : vector<1x128xf32> to vector<4x128xf32>
    %41 = arith.subf %33, %40 : vector<4x128xf32>
    %42 = math.exp %41 : vector<4x128xf32>
    %cst_14 = arith.constant dense<0.000000e+00> : vector<128xf32>
    %43 = vector.multi_reduction <add>, %42, %cst_14 [0] : vector<4x128xf32> to vector<128xf32>
    %44 = vector.shape_cast %43 : vector<128xf32> to vector<1x128xf32>
    %45 = tpu.reciprocal %44 : vector<1x128xf32> -> vector<1x128xf32>
    %46 = vector.broadcast %45 : vector<1x128xf32> to vector<4x128xf32>
    %47 = arith.mulf %42, %46 : vector<4x128xf32>
    %48 = arith.addf %25, %37 : vector<4x128xf32>
    %49 = arith.mulf %47, %37 : vector<4x128xf32>
    %50 = arith.addf %27, %49 : vector<4x128xf32>
    %51 = arith.addf %28, %47 : vector<4x128xf32>
    %c2_i32 = arith.constant 2 : i32
    %c0_15 = arith.constant 0 : index
    %c0_16 = arith.constant 0 : index
    %c0_17 = arith.constant 0 : index
    %52 = vector.load %arg5[%c0_15, %c0_16, %c0_17] : memref<1x4x128xf32, #tpu.memory_space<vmem>>, vector<1x4x128xf32>
    %53 = vector.shape_cast %52 : vector<1x4x128xf32> to vector<4x128xf32>
    %54 = arith.addf %53, %48 : vector<4x128xf32>
    %c0_18 = arith.constant 0 : index
    %c0_19 = arith.constant 0 : index
    %c0_20 = arith.constant 0 : index
    %55 = vector.load %arg5[%c0_18, %c0_19, %c0_20] : memref<1x4x128xf32, #tpu.memory_space<vmem>>, vector<1x4x128xf32>
    %56 = vector.shape_cast %55 : vector<1x4x128xf32> to vector<4x128xf32>
    %57 = vector.shape_cast %54 : vector<4x128xf32> to vector<1x4x128xf32>
    tpu.vector_store %arg5[%c0_18, %c0_19, %c0_20], %57 {strides = array<i32>} : memref<1x4x128xf32, #tpu.memory_space<vmem>>, vector<1x4x128xf32>,
    %c0_21 = arith.constant 0 : index
    %c0_22 = arith.constant 0 : index
    %c0_23 = arith.constant 0 : index
    %58 = vector.load %arg6[%c0_21, %c0_22, %c0_23] : memref<1x4x128xf32, #tpu.memory_space<vmem>>, vector<1x4x128xf32>
    %59 = vector.shape_cast %58 : vector<1x4x128xf32> to vector<4x128xf32>
    %60 = arith.addf %59, %50 : vector<4x128xf32>
    %c0_24 = arith.constant 0 : index
    %c0_25 = arith.constant 0 : index
    %c0_26 = arith.constant 0 : index
    %61 = vector.load %arg6[%c0_24, %c0_25, %c0_26] : memref<1x4x128xf32, #tpu.memory_space<vmem>>, vector<1x4x128xf32>
    %62 = vector.shape_cast %61 : vector<1x4x128xf32> to vector<4x128xf32>
    %63 = vector.shape_cast %60 : vector<4x128xf32> to vector<1x4x128xf32>
    tpu.vector_store %arg6[%c0_24, %c0_25, %c0_26], %63 {strides = array<i32>} : memref<1x4x128xf32, #tpu.memory_space<vmem>>, vector<1x4x128xf32>,
    %c0_27 = arith.constant 0 : index
    %c0_28 = arith.constant 0 : index
    %c0_29 = arith.constant 0 : index
    %64 = vector.load %arg7[%c0_27, %c0_28, %c0_29] : memref<1x4x128xf32, #tpu.memory_space<vmem>>, vector<1x4x128xf32>
    %65 = vector.shape_cast %64 : vector<1x4x128xf32> to vector<4x128xf32>
    %66 = arith.addf %65, %51 : vector<4x128xf32>
    %c0_30 = arith.constant 0 : index
    %c0_31 = arith.constant 0 : index
    %c0_32 = arith.constant 0 : index
    %67 = vector.load %arg7[%c0_30, %c0_31, %c0_32] : memref<1x4x128xf32, #tpu.memory_space<vmem>>, vector<1x4x128xf32>
    %68 = vector.shape_cast %67 : vector<1x4x128xf32> to vector<4x128xf32>
    %69 = vector.shape_cast %66 : vector<4x128xf32> to vector<1x4x128xf32>
    tpu.vector_store %arg7[%c0_30, %c0_31, %c0_32], %69 {strides = array<i32>} : memref<1x4x128xf32, #tpu.memory_space<vmem>>, vector<1x4x128xf32>,
    return
  }
  func.func @transform_0(%arg0: i32, %arg1: i32, %arg2: i32) -> (i32, i32, i32) {
    %c1_i32 = arith.constant 1 : i32
    %0 = arith.muli %arg0, %c1_i32 : i32
    %1 = arith.addi %0, %arg2 : i32
    %c0_i32 = arith.constant 0 : i32
    %2 = arith.minsi %1, %c0_i32 : i32
    %c0_i32_0 = arith.constant 0 : i32
    %c0_i32_1 = arith.constant 0 : i32
    return %arg1, %c0_i32_0, %2 : i32, i32, i32
  }
  func.func @transform_1(%arg0: i32, %arg1: i32, %arg2: i32) -> (i32, i32, i32) {
    %c1_i32 = arith.constant 1 : i32
    %0 = arith.muli %arg0, %c1_i32 : i32
    %1 = arith.addi %0, %arg2 : i32
    %c0_i32 = arith.constant 0 : i32
    %2 = arith.minsi %1, %c0_i32 : i32
    %c0_i32_0 = arith.constant 0 : i32
    %c0_i32_1 = arith.constant 0 : i32
    return %arg1, %c0_i32_0, %2 : i32, i32, i32
  }
  func.func @transform_2(%arg0: i32, %arg1: i32, %arg2: i32) -> (i32, i32, i32) {
    %c0_i32 = arith.constant 0 : i32
    %c0_i32_0 = arith.constant 0 : i32
    %c0_i32_1 = arith.constant 0 : i32
    return %arg0, %c0_i32, %c0_i32_0 : i32, i32, i32
  }
  func.func @transform_3(%arg0: i32, %arg1: i32, %arg2: i32) -> (i32, i32, i32) {
    %c0_i32 = arith.constant 0 : i32
    %c0_i32_0 = arith.constant 0 : i32
    %c0_i32_1 = arith.constant 0 : i32
    return %arg0, %c0_i32, %c0_i32_0 : i32, i32, i32
  }
  func.func @transform_4(%arg0: i32, %arg1: i32, %arg2: i32) -> (i32, i32, i32) {
    %c0_i32 = arith.constant 0 : i32
    %c0_i32_0 = arith.constant 0 : i32
    %c0_i32_1 = arith.constant 0 : i32
    return %arg0, %c0_i32, %c0_i32_0 : i32, i32, i32
  }
}

</mosaic_0001>

<llo_original>
// kernel: tpu_custom_call.1
$region0: #{tpu_custom_call.1}
  #allocation0 [shape = 'u32[]', space=smem, size = 0x4, offset = 0x4, fixed_abs, tag = 'smem constant byte address 0x4 - core index']
  #allocation1 [shape = 'u32[72,128]{1,0:T(1,128)}', space=vmem, size = 0x9000, scoped, tag = 'internal scratch']
  %s0 = inlined_call_operand.hbm [shape: f32[2,4,256], index: 0, kind: input, shape index: {}]
  %s1 = inlined_call_operand.hbm [shape: bf16[2,4,256], index: 1, kind: input, shape index: {}]
  %s2 = inlined_call_operand.hbm [shape: f32[1,4,128], index: 2, kind: output, shape index: {0}]
  %s3 = inlined_call_operand.hbm [shape: f32[1,4,128], index: 3, kind: output, shape index: {1}]
  %s4 = inlined_call_operand.hbm [shape: f32[1,4,128], index: 4, kind: output, shape index: {2}]
  %5 = xla_tuple %s2, %s3, %s4
  %s6 = sld [smem:[#allocation0]]
  $region69: #{tpu_custom_call.1} parent=0
    _
  %s8 = ssub.s32 1, %s6
  %s9 = scalar_select 0, %s8, %s6
  $region1: #{tpu_custom_call.1} parent=0
    #allocation2 [shape = 'u8[8192]{0}', space=vmem, size = 0x2000, scoped, tag = 'input window, operand 0']
    #allocation3 [shape = 's32[2]{0}', space=sflag, size = 0x8, scoped, tag = 'scoped memory for tpu_custom_call.1']
    #allocation4 [shape = 's32[2]{0}', space=sflag, size = 0x8, scoped, tag = 'scoped memory for tpu_custom_call.1']
    #allocation5 [shape = 'u8[4096]{0}', space=vmem, size = 0x1000, scoped, tag = 'input window, operand 1']
    #allocation6 [shape = 's32[2]{0}', space=sflag, size = 0x8, scoped, tag = 'scoped memory for tpu_custom_call.1']
    #allocation7 [shape = 'u8[2048]{0}', space=vmem, size = 0x800, scoped, tag = 'output window, operand 0, single buffered']
    #allocation8 [shape = 'u8[2048]{0}', space=vmem, size = 0x800, scoped, tag = 'output window, operand 1, single buffered']
    #allocation9 [shape = 's32[1]{0}', space=sflag, size = 0x4, scoped, tag = 'scoped memory for tpu_custom_call.1']
    #allocation10 [shape = 'u8[2048]{0}', space=vmem, size = 0x800, scoped, tag = 'output window, operand 2, single buffered']
    %10 = vsyncpa [#allocation3], 0
    %s11 = scalar_lea.sflag [#allocation3], 1
    %12 = vsyncpa %s11, 0
    %13 = vsyncpa [#allocation6], 0
    %s14 = scalar_lea.sflag [#allocation6], 1
    %15 = vsyncpa %s14, 0
    %16 = vsyncpa [#allocation4], 0
    %17 = vsyncpa [#allocation9], 0
    loop: start=0, step=1, limit=4
    $region2: #{tpu_custom_call.1} parent=1 // loop_pre_header
      _
    $region3: #{tpu_custom_call.1} parent=1 // loop_header
      %s19 = sphi 0, %s23
      %p20 = scmp.ge.s32.totalorder %s19, 4
      %s26 = sphi 0, %s45
      %s27 = sphi 0, %s41
      %s28 = sphi 0, %s37
      %s29 = sphi 0, %s26
      %s30 = sphi 0, %s27
      %s31 = sphi 0, %s28
      %s32 = sphi 0, %s29
      %s33 = sphi 0, %s30
      %s34 = sphi 0, %s31
      %s56 = sphi 0, %s58
      %s59 = sphi 0, %s56
      %s60 = sphi 0, %s59
      %s76 = sphi 0, %s60
      %s90 = sphi 0, %s92
      %s93 = sphi 0, %s90
      %s94 = sphi 0, %s93
      %s110 = sphi 0, %s94
      %s116 = sphi 0, %s118
      %s119 = sphi 0, %s116
      %s120 = sphi 0, %s119
      %s136 = sphi 0, %s120
      %s142 = sphi 0, %s144
      %s145 = sphi 0, %s142
      %s146 = sphi 0, %s145
      %s162 = sphi 0, %s146
      %s168 = sphi 0, %s170
      %s171 = sphi 0, %s168
      %s172 = sphi 0, %s171
      %s188 = sphi 0, %s172
    $region4: #{tpu_custom_call.1} parent=1 // loop_header_branch
      %22 = sbr.rel (%p20) target = $region8
    $region5: #{tpu_custom_call.1} parent=1 // loop_body
      %s24 = ssub.s32 %s19, 1
      %s25 = ssub.s32 %s19, 2
      %s35 = sadd.s32 1, %s28
      %p36 = scmp.ge.s32.totalorder %s35, 1
      %s37 = scalar_select %p36, 0, %s35
      %s38 = sadd.s32 1, %s27
      %s39 = scalar_select %p36, %s38, %s27
      %p40 = scmp.ge.s32.totalorder %s39, 2
      %s41 = scalar_select %p40, 0, %s39
      %s42 = sadd.s32 1, %s26
      %s43 = scalar_select %p40, %s42, %s26
      %p44 = scmp.ge.s32.totalorder %s43, 1
      %s45 = scalar_select %p44, 0, %s43
      %s46 = sadd.s32 %s26, %s28
      %p47 = scmp.lt.s32.totalorder %s46, 0
      %s48 = scalar_select %p47, %s46, 0
      %s49 = sadd.s32 %s45, %s37
      %p50 = scmp.lt.s32.totalorder %s49, 0
      %s51 = scalar_select %p50, %s49, 0
      %s52 = ssub.s32 %s27, %s41
      %s53 = ssub.s32 %s48, %s51
      %s54 = sor.u32 %s52, %s53
      %p55 = scmp.eq.s32.totalorder %s54, 0
      %s57 = sadd.s32 %s56, 1
      %s58 = scalar_select %p55, %s56, %s57
      %p61 = pneg %p55
      %p62 = scmp.eq.s32.totalorder %s19, 1
      %p63 = por %p61, %p62
      %p64 = scmp.ne.s32.totalorder %s56, %s59
      %p65 = scmp.eq.s32.totalorder %s19, 0
      %p66 = por %p64, %p65
      %p67 = scmp.ne.s32.totalorder %s56, %s59
      %p68 = scmp.eq.s32.totalorder %s24, 1
      %p69 = por %p67, %p68
      %p70 = scmp.ne.s32.totalorder %s59, %s60
      %p71 = scmp.eq.s32.totalorder %s24, 0
      %p72 = por %p70, %p71
      %p73 = scmp.ne.s32.totalorder %s59, %s60
      %p74 = scmp.eq.s32.totalorder %s25, 1
      %p75 = por %p73, %p74
      %p77 = scmp.ne.s32.totalorder %s60, %s76
      %p78 = scmp.eq.s32.totalorder %s25, 0
      %p79 = por %p77, %p78
      %s80 = sadd.s32 %s26, %s28
      %p81 = scmp.lt.s32.totalorder %s80, 0
      %s82 = scalar_select %p81, %s80, 0
      %s83 = sadd.s32 %s45, %s37
      %p84 = scmp.lt.s32.totalorder %s83, 0
      %s85 = scalar_select %p84, %s83, 0
      %s86 = ssub.s32 %s27, %s41
      %s87 = ssub.s32 %s82, %s85
      %s88 = sor.u32 %s86, %s87
      %p89 = scmp.eq.s32.totalorder %s88, 0
      %s91 = sadd.s32 %s90, 1
      %s92 = scalar_select %p89, %s90, %s91
      %p95 = pneg %p89
      %p96 = scmp.eq.s32.totalorder %s19, 1
      %p97 = por %p95, %p96
      %p98 = scmp.ne.s32.totalorder %s90, %s93
      %p99 = scmp.eq.s32.totalorder %s19, 0
      %p100 = por %p98, %p99
      %p101 = scmp.ne.s32.totalorder %s90, %s93
      %p102 = scmp.eq.s32.totalorder %s24, 1
      %p103 = por %p101, %p102
      %p104 = scmp.ne.s32.totalorder %s93, %s94
      %p105 = scmp.eq.s32.totalorder %s24, 0
      %p106 = por %p104, %p105
      %p107 = scmp.ne.s32.totalorder %s93, %s94
      %p108 = scmp.eq.s32.totalorder %s25, 1
      %p109 = por %p107, %p108
      %p111 = scmp.ne.s32.totalorder %s94, %s110
      %p112 = scmp.eq.s32.totalorder %s25, 0
      %p113 = por %p111, %p112
      %s114 = ssub.s32 %s26, %s45
      %p115 = scmp.eq.s32.totalorder %s114, 0
      %s117 = sadd.s32 %s116, 1
      %s118 = scalar_select %p115, %s116, %s117
      %p121 = pneg %p115
      %p122 = scmp.eq.s32.totalorder %s19, 1
      %p123 = por %p121, %p122
      %p124 = scmp.ne.s32.totalorder %s116, %s119
      %p125 = scmp.eq.s32.totalorder %s19, 0
      %p126 = por %p124, %p125
      %p127 = scmp.ne.s32.totalorder %s116, %s119
      %p128 = scmp.eq.s32.totalorder %s24, 1
      %p129 = por %p127, %p128
      %p130 = scmp.ne.s32.totalorder %s119, %s120
      %p131 = scmp.eq.s32.totalorder %s24, 0
      %p132 = por %p130, %p131
      %p133 = scmp.ne.s32.totalorder %s119, %s120
      %p134 = scmp.eq.s32.totalorder %s25, 1
      %p135 = por %p133, %p134
      %p137 = scmp.ne.s32.totalorder %s120, %s136
      %p138 = scmp.eq.s32.totalorder %s25, 0
      %p139 = por %p137, %p138
      %s140 = ssub.s32 %s26, %s45
      %p141 = scmp.eq.s32.totalorder %s140, 0
      %s143 = sadd.s32 %s142, 1
      %s144 = scalar_select %p141, %s142, %s143
      %p147 = pneg %p141
      %p148 = scmp.eq.s32.totalorder %s19, 1
      %p149 = por %p147, %p148
      %p150 = scmp.ne.s32.totalorder %s142, %s145
      %p151 = scmp.eq.s32.totalorder %s19, 0
      %p152 = por %p150, %p151
      %p153 = scmp.ne.s32.totalorder %s142, %s145
      %p154 = scmp.eq.s32.totalorder %s24, 1
      %p155 = por %p153, %p154
      %p156 = scmp.ne.s32.totalorder %s145, %s146
      %p157 = scmp.eq.s32.totalorder %s24, 0
      %p158 = por %p156, %p157
      %p159 = scmp.ne.s32.totalorder %s145, %s146
      %p160 = scmp.eq.s32.totalorder %s25, 1
      %p161 = por %p159, %p160
      %p163 = scmp.ne.s32.totalorder %s146, %s162
      %p164 = scmp.eq.s32.totalorder %s25, 0
      %p165 = por %p163, %p164
      %s166 = ssub.s32 %s26, %s45
      %p167 = scmp.eq.s32.totalorder %s166, 0
      %s169 = sadd.s32 %s168, 1
      %s170 = scalar_select %p167, %s168, %s169
      %p173 = pneg %p167
      %p174 = scmp.eq.s32.totalorder %s19, 1
      %p175 = por %p173, %p174
      %p176 = scmp.ne.s32.totalorder %s168, %s171
      %p177 = scmp.eq.s32.totalorder %s19, 0
      %p178 = por %p176, %p177
      %p179 = scmp.ne.s32.totalorder %s168, %s171
      %p180 = scmp.eq.s32.totalorder %s24, 1
      %p181 = por %p179, %p180
      %p182 = scmp.ne.s32.totalorder %s171, %s172
      %p183 = scmp.eq.s32.totalorder %s24, 0
      %p184 = por %p182, %p183
      %p185 = scmp.ne.s32.totalorder %s171, %s172
      %p186 = scmp.eq.s32.totalorder %s25, 1
      %p187 = por %p185, %p186
      %p189 = scmp.ne.s32.totalorder %s172, %s188
      %p190 = scmp.eq.s32.totalorder %s25, 0
      %p191 = por %p189, %p190
      %p192 = scmp.le.s32.totalorder 1, %s19
      %p193 = scmp.lt.s32.totalorder %s19, 3
      %p194 = pnand %p192, %p193
      %p195 = pneg %p194
      // Predicated region
      $region9: #{tpu_custom_call.1} parent=5 // pred_check
        _
      $region10: #{tpu_custom_call.1} parent=5 // pred_check_branch
        %197 = sbr.rel (%p194) target = $region12
      $region11: #{tpu_custom_call.1} parent=5 // pred_region
        %s198 = ssub.s32 %s19, 1
      $region12: #{tpu_custom_call.1} parent=5 // pred_fallthru
        _
      %p199 = scmp.lt.s32.totalorder %s19, 2
      // Predicated region
      $region13: #{tpu_custom_call.1} parent=5 // pred_check
        %p200 = pneg %p199
      $region14: #{tpu_custom_call.1} parent=5 // pred_check_branch
        %202 = sbr.rel (%p200) target = $region16
      $region15: #{tpu_custom_call.1} parent=5 // pred_region
        // Predicated region
        $region17: #{tpu_custom_call.1} parent=15 // pred_check
          %p203 = pneg %p66
        $region18: #{tpu_custom_call.1} parent=15 // pred_check_branch
          %205 = sbr.rel (%p203) target = $region20
        $region19: #{tpu_custom_call.1} parent=15 // pred_region
          %s206 = sand.u32 %s56, 1
          %s207 = scalar_lea.sflag [#allocation3], %s206
          %s208 = sand.u32 %s56, 1
          %s209 = smul.addr %s208, 8
          %s210 = scalar_lea.vmem [#allocation2], %s209
          %s211 = sadd.s32 %s26, %s28
          %p212 = scmp.lt.s32.totalorder %s211, 0
          %s213 = scalar_select %p212, %s211, 0
          %s214 = smul.u32 2, %s213
          %216 = vsyncadd %s207, 0
          %s217 = smul.addr %s27, 2
          %s218 = sadd.s32 %s214, %s217
          %s219 = smul.addr %s218, 4
          %s220 = scalar_lea.hbm %s0, %s219
          %s222 = sshll.u32 %s220, 4
          %s223 = int_to_ptr.hbm [resolvable:$true] %s222
          %s224 = sshll.u32 %s210, 4
          %s225 = int_to_ptr.vmem [resolvable:$true] %s224
          %227 = dma.hbm_to_vmem [thread:$0]  %s223, 128, %s225, %s207
        $region20: #{tpu_custom_call.1} parent=15 // pred_fallthru
          _
        // Predicated region
        $region21: #{tpu_custom_call.1} parent=15 // pred_check
          %p228 = pneg %p100
        $region22: #{tpu_custom_call.1} parent=15 // pred_check_branch
          %230 = sbr.rel (%p228) target = $region24
        $region23: #{tpu_custom_call.1} parent=15 // pred_region
          %s231 = sand.u32 %s90, 1
          %s232 = scalar_lea.sflag [#allocation6], %s231
          %s233 = sand.u32 %s90, 1
          %s234 = smul.addr %s233, 4
          %s235 = scalar_lea.vmem [#allocation5], %s234
          %s236 = sadd.s32 %s26, %s28
          %p237 = scmp.lt.s32.totalorder %s236, 0
          %s238 = scalar_select %p237, %s236, 0
          %s239 = smul.u32 2, %s238
          %241 = vsyncadd %s232, 0
          %s242 = smul.addr %s27, 2
          %s243 = sadd.s32 %s239, %s242
          %s244 = smul.addr %s243, 2
          %s245 = scalar_lea.hbm %s1, %s244
          %s247 = sshll.u32 %s245, 4
          %s248 = int_to_ptr.hbm [resolvable:$true] %s247
          %s249 = sshll.u32 %s235, 4
          %s250 = int_to_ptr.vmem [resolvable:$true] %s249
          %252 = dma.hbm_to_vmem [thread:$0]  %s248, 64, %s250, %s232
        $region24: #{tpu_custom_call.1} parent=15 // pred_fallthru
          _
      $region16: #{tpu_custom_call.1} parent=5 // pred_fallthru
        _
      %p253 = scmp.le.s32.totalorder 1, %s19
      %p254 = scmp.lt.s32.totalorder %s19, 3
      %p255 = pnand %p253, %p254
      %p256 = pneg %p255
      // Predicated region
      $region25: #{tpu_custom_call.1} parent=5 // pred_check
        _
      $region26: #{tpu_custom_call.1} parent=5 // pred_check_branch
        %258 = sbr.rel (%p255) target = $region28
      $region27: #{tpu_custom_call.1} parent=5 // pred_region
        %s259 = ssub.s32 %s19, 1
        %s260 = sand.u32 %s59, 1
        %s261 = scalar_lea.sflag [#allocation3], %s260
        %s262 = sand.u32 %s59, 1
        %s263 = smul.addr %s262, 8
        %s264 = scalar_lea.vmem [#allocation2], %s263
        // Predicated region
        $region29: #{tpu_custom_call.1} parent=27 // pred_check
          %p265 = pneg %p72
        $region30: #{tpu_custom_call.1} parent=27 // pred_check_branch
          %267 = sbr.rel (%p265) target = $region32
        $region31: #{tpu_custom_call.1} parent=27 // pred_region
          %269 = dma.done %s261, 128
        $region32: #{tpu_custom_call.1} parent=27 // pred_fallthru
          _
        %s270 = sand.u32 %s93, 1
        %s271 = scalar_lea.sflag [#allocation6], %s270
        %s272 = sand.u32 %s93, 1
        %s273 = smul.addr %s272, 4
        %s274 = scalar_lea.vmem [#allocation5], %s273
        // Predicated region
        $region33: #{tpu_custom_call.1} parent=27 // pred_check
          %p275 = pneg %p106
        $region34: #{tpu_custom_call.1} parent=27 // pred_check_branch
          %277 = sbr.rel (%p275) target = $region36
        $region35: #{tpu_custom_call.1} parent=27 // pred_region
          %279 = dma.done %s271, 64
        $region36: #{tpu_custom_call.1} parent=27 // pred_fallthru
          _
        %s280 = sand.u32 %s59, 1
        %s281 = scalar_lea.sflag [#allocation3], %s280
        %s282 = sand.u32 %s59, 1
        %s283 = smul.addr %s282, 8
        %s284 = scalar_lea.vmem [#allocation2], %s283
        %p285 = pneg %p72
        %p286 = pneg %p69
        %s287 = sand.u32 %s93, 1
        %s288 = scalar_lea.sflag [#allocation6], %s287
        %s289 = sand.u32 %s93, 1
        %s290 = smul.addr %s289, 4
        %s291 = scalar_lea.vmem [#allocation5], %s290
        %p292 = pneg %p106
        %p293 = pneg %p103
        %p294 = pneg %p132
        %p295 = pneg %p129
        %p296 = pneg %p158
        %p297 = pneg %p155
        %p298 = pneg %p184
        %p299 = pneg %p181
        %s300 = sadd.s32 %s29, %s31
        %p301 = scmp.lt.s32.totalorder %s300, 0
        %s302 = scalar_select %p301, %s300, 0
        %s303 = smul.u32 2, %s302
        %s304 = sadd.s32 %s29, %s31
        %p305 = scmp.lt.s32.totalorder %s304, 0
        %s306 = scalar_select %p305, %s304, 0
        %s307 = smul.u32 2, %s306
        %p308 = scmp.eq.s32.totalorder %s30, 0
        %p309 = scmp.eq.s32.totalorder %s31, 0
        %p310 = pnand %p308, %p309
        %p311 = pneg %p310
        // Predicated region
        $region37: #{tpu_custom_call.1} parent=27 // pred_check
          _
        $region38: #{tpu_custom_call.1} parent=27 // pred_check_branch
          %313 = sbr.rel (%p310) target = $region40
        $region39: #{tpu_custom_call.1} parent=27 // pred_region
          %314 = vst [vmem:[#allocation7] sm:$0xf] 0.0
          %315 = vst [vmem:[#allocation8] sm:$0xf] 0.0
          %316 = vst [vmem:[#allocation10] sm:$0xf] 0.0
        $region40: #{tpu_custom_call.1} parent=27 // pred_fallthru
          _
        %v317 = vld [vmem:[%s264] sm:$0xf]
        %v318 = vld [vmem:[%s274] sm:$0x3]
        %v319 = vunpack.c.l.bf16 %v318
        %vm320 = vcmask 1043456
        %v321 = vsel %vm320, %v317, -inf
        %v322 = vrot.slane %v321, 4
        %v323 = vmax.f32 %v321, %v322
        %v324 = vrot.slane %v323, 2
        %v325 = vmax.f32 %v323, %v324
        %v326 = vrot.slane %v325, 1
        %v327 = vmax.f32 %v325, %v326
        %v328 = vsub.f32 %v317, %v327
        %v329 = vmul.f32 %v328, 1.442695
        %v330 = vpow.pop %v329
        %v331 = vsel %vm320, %v330, 0.0
        %v332 = vrot.slane %v331, 4
        %v333 = vadd.f32 %v331, %v332
        %v334 = vrot.slane %v333, 2
        %v335 = vadd.f32 %v333, %v334
        %v336 = vrot.slane %v335, 1
        %v337 = vadd.f32 %v335, %v336
        %v338 = vrcp.pop %v337
        %v339 = vmul.f32 %v337, %v338
        %v340 = vsub.f32 1.0, %v339
        %v341 = vmul.f32 %v338, %v340
        %v342 = vadd.f32 %v338, %v341
        %vm343 = vweird.f32 %v337
        %vm344 = vweird.f32 %v338
        %vm345 = vmor %vm343, %vm344
        %v346 = vsel %vm345, %v338, %v342
        %v347 = vand.u32 2147483647, %v337
        %vm348 = vcmp.eq.f32.partialorder %v347, 8.507059e+37
        %v349 = vand.u32 %v337, 2147483648
        %v350 = vor.u32 1.1754944e-38, %v349
        %v351 = vsel %vm348, %v350, %v346
        %v352 = vmul.f32 %v330, %v351
        %v353 = vadd.f32 %v319, 0.0
        %v354 = vmul.f32 %v352, %v319
        %v355 = vadd.f32 %v354, 0.0
        %v356 = vadd.f32 %v352, 0.0
        %s357 = scalar_lea.vmem %s264, 4 [#allocation2]
        %v358 = vld [vmem:[%s357] sm:$0xf]
        %s359 = scalar_lea.vmem %s274, 2 [#allocation5]
        %v360 = vld [vmem:[%s359] sm:$0x3]
        %v361 = vunpack.c.l.bf16 %v360
        %v362 = vsel %vm320, %v358, -inf
        %v363 = vrot.slane %v362, 4
        %v364 = vmax.f32 %v362, %v363
        %v365 = vrot.slane %v364, 2
        %v366 = vmax.f32 %v364, %v365
        %v367 = vrot.slane %v366, 1
        %v368 = vmax.f32 %v366, %v367
        %v369 = vsub.f32 %v358, %v368
        %v370 = vmul.f32 %v369, 1.442695
        %v371 = vpow.pop %v370
        %v372 = vsel %vm320, %v371, 0.0
        %v373 = vrot.slane %v372, 4
        %v374 = vadd.f32 %v372, %v373
        %v375 = vrot.slane %v374, 2
        %v376 = vadd.f32 %v374, %v375
        %v377 = vrot.slane %v376, 1
        %v378 = vadd.f32 %v376, %v377
        %v379 = vrcp.pop %v378
        %v380 = vmul.f32 %v378, %v379
        %v381 = vsub.f32 1.0, %v380
        %v382 = vmul.f32 %v379, %v381
        %v383 = vadd.f32 %v379, %v382
        %vm384 = vweird.f32 %v378
        %vm385 = vweird.f32 %v379
        %vm386 = vmor %vm384, %vm385
        %v387 = vsel %vm386, %v379, %v383
        %v388 = vand.u32 2147483647, %v378
        %vm389 = vcmp.eq.f32.partialorder %v388, 8.507059e+37
        %v390 = vand.u32 %v378, 2147483648
        %v391 = vor.u32 1.1754944e-38, %v390
        %v392 = vsel %vm389, %v391, %v387
        %v393 = vmul.f32 %v371, %v392
        %v394 = vadd.f32 %v353, %v361
        %v395 = vmul.f32 %v393, %v361
        %v396 = vadd.f32 %v355, %v395
        %v397 = vadd.f32 %v356, %v393
        %v398 = vld [vmem:[#allocation7] sm:$0xf]
        %v399 = vadd.f32 %v398, %v394
        %400 = vst [vmem:[#allocation7] sm:$0xf] %v399
        %v401 = vld [vmem:[#allocation8] sm:$0xf]
        %v402 = vadd.f32 %v401, %v396
        %403 = vst [vmem:[#allocation8] sm:$0xf] %v402
        %v404 = vld [vmem:[#allocation10] sm:$0xf]
        %v405 = vadd.f32 %v404, %v397
        %406 = vst [vmem:[#allocation10] sm:$0xf] %v405
        // Predicated region
        $region41: #{tpu_custom_call.1} parent=27 // pred_check
          %p407 = pneg %p129
        $region42: #{tpu_custom_call.1} parent=27 // pred_check_branch
          %409 = sbr.rel (%p407) target = $region44
        $region43: #{tpu_custom_call.1} parent=27 // pred_region
          %411 = vsyncadd [#allocation4], 0
          %s412 = smul.addr %s29, 4
          %s413 = scalar_lea.hbm %s2, %s412
          %s415 = sshll.u32 [#allocation7], 4
          %s416 = int_to_ptr.vmem [resolvable:$true] %s415
          %s417 = sshll.u32 %s413, 4
          %s418 = int_to_ptr.hbm [resolvable:$true] %s417
          %420 = dma.vmem_to_hbm [thread:$0]  %s416, 64, %s418, [#allocation4]
        $region44: #{tpu_custom_call.1} parent=27 // pred_fallthru
          _
        // Predicated region
        $region45: #{tpu_custom_call.1} parent=27 // pred_check
          %p421 = pneg %p155
        $region46: #{tpu_custom_call.1} parent=27 // pred_check_branch
          %423 = sbr.rel (%p421) target = $region48
        $region47: #{tpu_custom_call.1} parent=27 // pred_region
          %425 = vsyncadd [#allocation9], 0
          %s426 = smul.addr %s29, 4
          %s427 = scalar_lea.hbm %s3, %s426
          %s429 = sshll.u32 [#allocation8], 4
          %s430 = int_to_ptr.vmem [resolvable:$true] %s429
          %s431 = sshll.u32 %s427, 4
          %s432 = int_to_ptr.hbm [resolvable:$true] %s431
          %434 = dma.vmem_to_hbm [thread:$0]  %s430, 64, %s432, [#allocation9]
        $region48: #{tpu_custom_call.1} parent=27 // pred_fallthru
          _
        // Predicated region
        $region49: #{tpu_custom_call.1} parent=27 // pred_check
          %p435 = pneg %p181
        $region50: #{tpu_custom_call.1} parent=27 // pred_check_branch
          %437 = sbr.rel (%p435) target = $region52
        $region51: #{tpu_custom_call.1} parent=27 // pred_region
          %439 = vsyncadd [#allocation9], 0
          %s440 = smul.addr %s29, 4
          %s441 = scalar_lea.hbm %s4, %s440
          %s443 = sshll.u32 [#allocation10], 4
          %s444 = int_to_ptr.vmem [resolvable:$true] %s443
          %s445 = sshll.u32 %s441, 4
          %s446 = int_to_ptr.hbm [resolvable:$true] %s445
          %448 = dma.vmem_to_hbm [thread:$0]  %s444, 64, %s446, [#allocation9]
        $region52: #{tpu_custom_call.1} parent=27 // pred_fallthru
          _
        // Predicated region
        $region53: #{tpu_custom_call.1} parent=27 // pred_check
          %p449 = pneg %p129
        $region54: #{tpu_custom_call.1} parent=27 // pred_check_branch
          %451 = sbr.rel (%p449) target = $region56
        $region55: #{tpu_custom_call.1} parent=27 // pred_region
          %453 = dma.done [#allocation4], 64
        $region56: #{tpu_custom_call.1} parent=27 // pred_fallthru
          _
        // Predicated region
        $region57: #{tpu_custom_call.1} parent=27 // pred_check
          %p454 = pneg %p155
        $region58: #{tpu_custom_call.1} parent=27 // pred_check_branch
          %456 = sbr.rel (%p454) target = $region60
        $region59: #{tpu_custom_call.1} parent=27 // pred_region
          %458 = dma.done [#allocation9], 64
        $region60: #{tpu_custom_call.1} parent=27 // pred_fallthru
          _
        // Predicated region
        $region61: #{tpu_custom_call.1} parent=27 // pred_check
          %p459 = pneg %p181
        $region62: #{tpu_custom_call.1} parent=27 // pred_check_branch
          %461 = sbr.rel (%p459) target = $region64
        $region63: #{tpu_custom_call.1} parent=27 // pred_region
          %463 = dma.done [#allocation9], 64
        $region64: #{tpu_custom_call.1} parent=27 // pred_fallthru
          _
      $region28: #{tpu_custom_call.1} parent=5 // pred_fallthru
        _
      %p464 = scmp.le.s32.totalorder 2, %s19
      // Predicated region
      $region65: #{tpu_custom_call.1} parent=5 // pred_check
        %p465 = pneg %p464
      $region66: #{tpu_custom_call.1} parent=5 // pred_check_branch
        %467 = sbr.rel (%p465) target = $region68
      $region67: #{tpu_custom_call.1} parent=5 // pred_region
        %s468 = ssub.s32 %s19, 2
      $region68: #{tpu_custom_call.1} parent=5 // pred_fallthru
        _
    $region6: #{tpu_custom_call.1} parent=1 // loop_footer
      %s23 = sadd.s32 1, %s19
    $region7: #{tpu_custom_call.1} parent=1 // loop_footer_branch
      %18 = sbr.rel target = $region3
    $region8: #{tpu_custom_call.1} parent=1 // loop_exit
      _
    %469 = vsyncpa [#allocation3], 1
    %s470 = scalar_lea.sflag [#allocation3], 1
    %471 = vsyncpa %s470, 1
    %472 = vsyncpa [#allocation6], 1
    %s473 = scalar_lea.sflag [#allocation6], 1
    %474 = vsyncpa %s473, 1
    %475 = vsyncpa [#allocation4], 1
    %s476 = scalar_lea.sflag [#allocation4], 1
    %477 = vsyncpa %s476, 1
    %478 = vsyncpa [#allocation9], 1

</llo_original>
